<compile_context>
chip_gen: v5e
topology: v5e:2x2
jax: 0.10.0
libtpu: 0.0.40
codegen_flags: <defaults>
</compile_context>

<pallas_src>
import jax
import jax.numpy as jnp
from jax.experimental import pallas as pl
from jax.experimental.pallas import tpu as pltpu

# ---------------- model hyper-parameters (small, synthetic) ----------------
FILTER_SIZES = (2, 3, 4, 5)
NUM_FILTERS = 50          # num_filters in the PyTorch module
EMBED_SIZE = 32           # embed_size
SEQ_LEN = 16              # L (token sequence length)
VOCAB = 100               # max_features
N_LABELS = 8              # len(mlb.classes_)
BATCH = 2

# ---------------- packed / padded layout constants ----------------
KMAX = max(FILTER_SIZES)                               # 5
T_MAX = SEQ_LEN - min(FILTER_SIZES) + 1                # 15 (longest conv output)
T_PAD = ((T_MAX + 7) // 8) * 8                         # 16 (sublane aligned)
F_PAD = 64                                             # filters 50 -> 64 lanes
FOUT = len(FILTER_SIZES) * F_PAD                       # 256 (lane-dense conv out)
N_PAD = 128                                            # logits 8 -> 128 lanes


def _cnn_text_kernel(p_ref,      # (B*T_PAD, KMAX*E)  bf16  im2col patches
                     w_ref,      # (KMAX*E, FOUT)     bf16  packed conv weights
                     b_ref,      # (1, FOUT)          f32   packed conv biases
                     wfc_ref,    # (FOUT, N_PAD)      bf16  packed FC weight
                     bfc_ref,    # (1, N_PAD)         f32   packed FC bias
                     o_ref):     # (B, N_PAD)         f32   padded logits
    # One fused im2col matmul for all four filter sizes (MXU, f32 accumulate).
    s = jnp.dot(p_ref[...], w_ref[...], preferred_element_type=jnp.float32)
    s = jnp.maximum(s + b_ref[...], 0.0)                      # bias + ReLU

    # Mask positions that are invalid for a given filter size (and the T_PAD
    # padding row).  ReLU output is >= 0, so forcing invalid entries to 0
    # leaves the subsequent max-pool unchanged.
    row = jax.lax.broadcasted_iota(jnp.int32, s.shape, 0)
    lane = jax.lax.broadcasted_iota(jnp.int32, s.shape, 1)
    t = row % T_PAD
    valid = jnp.zeros(s.shape, jnp.bool_)
    for c, K in enumerate(FILTER_SIZES):
        in_slot = (lane >= c * F_PAD) & (lane < (c + 1) * F_PAD)
        valid = valid | (in_slot & (t < (SEQ_LEN - K + 1)))
    s = jnp.where(valid, s, 0.0)

    # Global max-pool over the (padded) sequence axis, per batch row.
    n_batch = p_ref.shape[0] // T_PAD
    pooled = jnp.concatenate(
        [jnp.max(s[b * T_PAD:(b + 1) * T_PAD, :], axis=0, keepdims=True)
         for b in range(n_batch)], axis=0)                    # (B, FOUT) f32

    # TODO(synk): dropout(0.5) is inference-mode identity here (no RNG mask).
    logits = jnp.dot(pooled.astype(jnp.bfloat16), wfc_ref[...],
                     preferred_element_type=jnp.float32) + bfc_ref[...]
    o_ref[...] = logits.astype(o_ref.dtype)                   # full 128-lane store


def _pack_params(params):
    """Host-side repack of weights into lane-dense, MXU-friendly layouts."""
    E = EMBED_SIZE
    w_packed = jnp.zeros((KMAX * E, FOUT), jnp.float32)
    b_packed = jnp.zeros((1, FOUT), jnp.float32)
    for c, K in enumerate(FILTER_SIZES):
        w = params[f"conv_w{K}"].reshape(K * E, NUM_FILTERS)        # (K*E, 50)
        w_packed = w_packed.at[:K * E,
                               c * F_PAD:c * F_PAD + NUM_FILTERS].set(w)
        b_packed = b_packed.at[:, c * F_PAD:c * F_PAD + NUM_FILTERS].set(
            params[f"conv_b{K}"])
    wfc_packed = jnp.zeros((FOUT, N_PAD), jnp.float32)
    for c in range(len(FILTER_SIZES)):
        wfc_packed = wfc_packed.at[
            c * F_PAD:c * F_PAD + NUM_FILTERS, :N_LABELS].set(
                params["fc_w"][c * NUM_FILTERS:(c + 1) * NUM_FILTERS, :])
    bfc_packed = jnp.zeros((1, N_PAD), jnp.float32).at[:, :N_LABELS].set(
        params["fc_b"])
    return (w_packed.astype(jnp.bfloat16), b_packed,
            wfc_packed.astype(jnp.bfloat16), bfc_packed)


def cnn_text_forward(token_ids, params):
    """token_ids: (B, L) int32.  Returns logits (B, n_labels) float32."""
    B, L = token_ids.shape
    E = EMBED_SIZE

    # Embedding lookup + im2col patch construction (host-side layout glue).
    # TODO(synk): embedding gather could be fused in-kernel via scalar prefetch
    # + manual DMA; kept as jnp.take here (tiny absolute cost at this size).
    emb = jnp.take(params["embedding"], token_ids, axis=0)          # (B, L, E)
    emb_pad = jnp.pad(emb, ((0, 0), (0, T_PAD + KMAX - 1 - L), (0, 0)))
    patches = jnp.concatenate(
        [emb_pad[:, k:k + T_PAD, :] for k in range(KMAX)], axis=-1)  # (B,T_PAD,KMAX*E)
    patches = patches.reshape(B * T_PAD, KMAX * E).astype(jnp.bfloat16)

    w_packed, b_packed, wfc_packed, bfc_packed = _pack_params(params)

    def full(a):
        return pl.BlockSpec(a.shape, lambda i: (0,) * a.ndim)

    logits_pad = pl.pallas_call(
        _cnn_text_kernel,
        out_shape=jax.ShapeDtypeStruct((B, N_PAD), jnp.float32),
        grid=(1,),
        in_specs=[full(patches), full(w_packed), full(b_packed),
                  full(wfc_packed), full(bfc_packed)],
        out_specs=pl.BlockSpec((B, N_PAD), lambda i: (0, 0)),
        compiler_params=pltpu.CompilerParams(
            dimension_semantics=("arbitrary",)),
    )(patches, w_packed, b_packed, wfc_packed, bfc_packed)
    return logits_pad[:, :N_LABELS]


def _reference_forward(token_ids, params):
    """Plain-JAX f32 reference mirroring the PyTorch forward (eval dropout)."""
    emb = jnp.take(params["embedding"], token_ids, axis=0)   # (B, L, E)
    feats = []
    for K in FILTER_SIZES:
        w = params[f"conv_w{K}"]                             # (K, E, F)
        b = params[f"conv_b{K}"]                             # (1, F)
        T = SEQ_LEN - K + 1
        acc = jnp.zeros((emb.shape[0], T, NUM_FILTERS), jnp.float32)
        for k in range(K):
            acc = acc + jnp.einsum("ble,ef->blf", emb[:, k:k + T, :], w[k])
        acc = jnp.maximum(acc + b[None, :, :], 0.0)
        feats.append(jnp.max(acc, axis=1))                   # (B, F)
    feat = jnp.concatenate(feats, axis=1)                    # (B, 4F)
    return feat @ params["fc_w"] + params["fc_b"]


def make_params(key):
    ks = jax.random.split(key, 2 + 2 * len(FILTER_SIZES) + 2)
    params = {}
    params["embedding"] = jax.random.normal(
        ks[0], (VOCAB, EMBED_SIZE), jnp.float32) * 0.1
    i = 1
    for K in FILTER_SIZES:
        params[f"conv_w{K}"] = jax.random.normal(
            ks[i], (K, EMBED_SIZE, NUM_FILTERS), jnp.float32) * 0.05
        params[f"conv_b{K}"] = jax.random.normal(
            ks[i + 1], (1, NUM_FILTERS), jnp.float32) * 0.05
        i += 2
    params["fc_w"] = jax.random.normal(
        ks[i], (len(FILTER_SIZES) * NUM_FILTERS, N_LABELS), jnp.float32) * 0.05
    params["fc_b"] = jax.random.normal(
        ks[i + 1], (1, N_LABELS), jnp.float32) * 0.05
    return params


if __name__ == "__main__":
    key = jax.random.PRNGKey(0)
    pkey, xkey = jax.random.split(key)
    params = make_params(pkey)
    token_ids = jax.random.randint(xkey, (BATCH, SEQ_LEN), 0, VOCAB, jnp.int32)

    logits = cnn_text_forward(token_ids, params)
    logits = jax.block_until_ready(logits)

    ref = _reference_forward(token_ids, params)
    assert logits.shape == (BATCH, N_LABELS)
    # bf16 MXU inputs (f32 accumulation) vs f32 reference -> loose tolerance.
    assert jnp.allclose(logits, ref, atol=2e-2, rtol=2e-2)
    print("KERNEL_OK")
</pallas_src>

<mosaic_0001>
module attributes {stable_mosaic.version = 11 : i64} {
  func.func @_cnn_text_kernel(%arg0: i32, %arg1: memref<32x160xbf16, #tpu.memory_space<vmem>>, %arg2: memref<160x256xbf16, #tpu.memory_space<vmem>>, %arg3: memref<1x256xf32, #tpu.memory_space<vmem>>, %arg4: memref<256x128xbf16, #tpu.memory_space<vmem>>, %arg5: memref<1x128xf32, #tpu.memory_space<vmem>>, %arg6: memref<2x128xf32, #tpu.memory_space<vmem>>) attributes {dimension_semantics = [#tpu.dimension_semantics<arbitrary>], iteration_bounds = array<i64: 1>, scalar_prefetch = 0 : i64, scratch_operands = 0 : i64, tpu.core_type = #tpu.core_type<tc>, window_params = [{pipeline_mode = #tpu.pipeline_mode<synchronous>, transform_indices = @transform_0, window_bounds = array<i64: 32, 160>}, {pipeline_mode = #tpu.pipeline_mode<synchronous>, transform_indices = @transform_1, window_bounds = array<i64: 160, 256>}, {pipeline_mode = #tpu.pipeline_mode<synchronous>, transform_indices = @transform_2, window_bounds = array<i64: 1, 256>}, {pipeline_mode = #tpu.pipeline_mode<synchronous>, transform_indices = @transform_3, window_bounds = array<i64: 256, 128>}, {pipeline_mode = #tpu.pipeline_mode<synchronous>, transform_indices = @transform_4, window_bounds = array<i64: 1, 128>}, {pipeline_mode = #tpu.pipeline_mode<synchronous>, transform_indices = @transform_5, window_bounds = array<i64: 2, 128>}]} {
    %c0 = arith.constant 0 : index
    %c0_0 = arith.constant 0 : index
    %0 = vector.load %arg1[%c0, %c0_0] : memref<32x160xbf16, #tpu.memory_space<vmem>>, vector<32x160xbf16>
    %c0_1 = arith.constant 0 : index
    %c0_2 = arith.constant 0 : index
    %1 = vector.load %arg2[%c0_1, %c0_2] : memref<160x256xbf16, #tpu.memory_space<vmem>>, vector<160x256xbf16>
    %cst = arith.constant dense<0.000000e+00> : vector<32x256xf32>
    %2 = tpu.matmul %0, %1, %cst {dimension_numbers = #tpu.dot_dimension_numbers<[1], [0], [0], [1], [0, 0, 1, 1], [], []>} : vector<32x160xbf16>, vector<160x256xbf16>, vector<32x256xf32> -> vector<32x256xf32>
    %c0_3 = arith.constant 0 : index
    %c0_4 = arith.constant 0 : index
    %3 = vector.load %arg3[%c0_3, %c0_4] : memref<1x256xf32, #tpu.memory_space<vmem>>, vector<1x256xf32>
    %4 = vector.broadcast %3 : vector<1x256xf32> to vector<32x256xf32>
    %5 = arith.addf %2, %4 : vector<32x256xf32>
    %cst_5 = arith.constant 0.000000e+00 : f32
    %6 = vector.broadcast %cst_5 : f32 to vector<32x256xf32>
    %7 = arith.maximumf %5, %6 : vector<32x256xf32>
    %8 = tpu.iota {dimensions = array<i32: 0>} : vector<32x256xi32>
    %9 = tpu.iota {dimensions = array<i32: 1>} : vector<32x256xi32>
    %c16_i32 = arith.constant 16 : i32
    %c0_i32 = arith.constant 0 : i32
    %10 = arith.cmpi eq, %c16_i32, %c0_i32 : i32
    %c1_i32 = arith.constant 1 : i32
    %11 = arith.select %10, %c1_i32, %c16_i32 : i32
    %12 = vector.broadcast %11 : i32 to vector<32x256xi32>
    %13 = arith.remsi %8, %12 : vector<32x256xi32>
    %c0_i32_6 = arith.constant 0 : i32
    %14 = vector.broadcast %c0_i32_6 : i32 to vector<32x256xi32>
    %15 = arith.cmpi ne, %13, %14 : vector<32x256xi32>
    %c0_i32_7 = arith.constant 0 : i32
    %16 = vector.broadcast %c0_i32_7 : i32 to vector<32x256xi32>
    %17 = arith.cmpi slt, %13, %16 : vector<32x256xi32>
    %c0_i32_8 = arith.constant 0 : i32
    %18 = arith.cmpi slt, %11, %c0_i32_8 : i32
    %19 = vector.broadcast %18 : i1 to vector<32x256xi1>
    %20 = vector.broadcast %19 : vector<32x256xi1> to vector<32x256xi1>
    %21 = arith.xori %17, %20 : vector<32x256xi1>
    %22 = arith.andi %21, %15 : vector<32x256xi1>
    %23 = vector.broadcast %11 : i32 to vector<32x256xi32>
    %24 = arith.addi %13, %23 : vector<32x256xi32>
    %25 = arith.select %22, %24, %13 : vector<32x256xi1>, vector<32x256xi32>
    %false = arith.constant false
    %26 = vector.broadcast %false : i1 to vector<32x256xi1>
    %c0_i32_9 = arith.constant 0 : i32
    %27 = vector.broadcast %c0_i32_9 : i32 to vector<32x256xi32>
    %28 = arith.cmpi sge, %9, %27 : vector<32x256xi32>
    %c64_i32 = arith.constant 64 : i32
    %29 = vector.broadcast %c64_i32 : i32 to vector<32x256xi32>
    %30 = arith.cmpi slt, %9, %29 : vector<32x256xi32>
    %31 = arith.andi %28, %30 : vector<32x256xi1>
    %c15_i32 = arith.constant 15 : i32
    %32 = vector.broadcast %c15_i32 : i32 to vector<32x256xi32>
    %33 = arith.cmpi slt, %25, %32 : vector<32x256xi32>
    %34 = arith.andi %31, %33 : vector<32x256xi1>
    %35 = arith.ori %26, %34 : vector<32x256xi1>
    %c64_i32_10 = arith.constant 64 : i32
    %36 = vector.broadcast %c64_i32_10 : i32 to vector<32x256xi32>
    %37 = arith.cmpi sge, %9, %36 : vector<32x256xi32>
    %c128_i32 = arith.constant 128 : i32
    %38 = vector.broadcast %c128_i32 : i32 to vector<32x256xi32>
    %39 = arith.cmpi slt, %9, %38 : vector<32x256xi32>
    %40 = arith.andi %37, %39 : vector<32x256xi1>
    %c14_i32 = arith.constant 14 : i32
    %41 = vector.broadcast %c14_i32 : i32 to vector<32x256xi32>
    %42 = arith.cmpi slt, %25, %41 : vector<32x256xi32>
    %43 = arith.andi %40, %42 : vector<32x256xi1>
    %44 = arith.ori %35, %43 : vector<32x256xi1>
    %c128_i32_11 = arith.constant 128 : i32
    %45 = vector.broadcast %c128_i32_11 : i32 to vector<32x256xi32>
    %46 = arith.cmpi sge, %9, %45 : vector<32x256xi32>
    %c192_i32 = arith.constant 192 : i32
    %47 = vector.broadcast %c192_i32 : i32 to vector<32x256xi32>
    %48 = arith.cmpi slt, %9, %47 : vector<32x256xi32>
    %49 = arith.andi %46, %48 : vector<32x256xi1>
    %c13_i32 = arith.constant 13 : i32
    %50 = vector.broadcast %c13_i32 : i32 to vector<32x256xi32>
    %51 = arith.cmpi slt, %25, %50 : vector<32x256xi32>
    %52 = arith.andi %49, %51 : vector<32x256xi1>
    %53 = arith.ori %44, %52 : vector<32x256xi1>
    %c192_i32_12 = arith.constant 192 : i32
    %54 = vector.broadcast %c192_i32_12 : i32 to vector<32x256xi32>
    %55 = arith.cmpi sge, %9, %54 : vector<32x256xi32>
    %c256_i32 = arith.constant 256 : i32
    %56 = vector.broadcast %c256_i32 : i32 to vector<32x256xi32>
    %57 = arith.cmpi slt, %9, %56 : vector<32x256xi32>
    %58 = arith.andi %55, %57 : vector<32x256xi1>
    %c12_i32 = arith.constant 12 : i32
    %59 = vector.broadcast %c12_i32 : i32 to vector<32x256xi32>
    %60 = arith.cmpi slt, %25, %59 : vector<32x256xi32>
    %61 = arith.andi %58, %60 : vector<32x256xi1>
    %62 = arith.ori %53, %61 : vector<32x256xi1>
    %cst_13 = arith.constant 0.000000e+00 : f32
    %63 = vector.broadcast %cst_13 : f32 to vector<32x256xf32>
    %64 = arith.select %62, %7, %63 : vector<32x256xi1>, vector<32x256xf32>
    %65 = vector.extract_strided_slice %64 {offsets = [0, 0], sizes = [16, 256], strides = [1, 1]} : vector<32x256xf32> to vector<16x256xf32>
    %cst_14 = arith.constant dense<0xFF800000> : vector<256xf32>
    %66 = vector.multi_reduction <maximumf>, %65, %cst_14 [0] : vector<16x256xf32> to vector<256xf32>
    %67 = vector.shape_cast %66 : vector<256xf32> to vector<1x256xf32>
    %68 = vector.extract_strided_slice %64 {offsets = [16, 0], sizes = [16, 256], strides = [1, 1]} : vector<32x256xf32> to vector<16x256xf32>
    %cst_15 = arith.constant dense<0xFF800000> : vector<256xf32>
    %69 = vector.multi_reduction <maximumf>, %68, %cst_15 [0] : vector<16x256xf32> to vector<256xf32>
    %70 = vector.shape_cast %69 : vector<256xf32> to vector<1x256xf32>
    %71 = tpu.concatenate %67, %70 in 0 : vector<1x256xf32>, vector<1x256xf32> -> vector<2x256xf32>
    %72 = arith.truncf %71 : vector<2x256xf32> to vector<2x256xbf16>
    %c0_16 = arith.constant 0 : index
    %c0_17 = arith.constant 0 : index
    %73 = vector.load %arg4[%c0_16, %c0_17] : memref<256x128xbf16, #tpu.memory_space<vmem>>, vector<256x128xbf16>
    %cst_18 = arith.constant dense<0.000000e+00> : vector<2x128xf32>
    %74 = tpu.matmul %72, %73, %cst_18 {dimension_numbers = #tpu.dot_dimension_numbers<[1], [0], [0], [1], [0, 0, 1, 1], [], []>} : vector<2x256xbf16>, vector<256x128xbf16>, vector<2x128xf32> -> vector<2x128xf32>
    %c0_19 = arith.constant 0 : index
    %c0_20 = arith.constant 0 : index
    %75 = vector.load %arg5[%c0_19, %c0_20] : memref<1x128xf32, #tpu.memory_space<vmem>>, vector<1x128xf32>
    %76 = vector.broadcast %75 : vector<1x128xf32> to vector<2x128xf32>
    %77 = arith.addf %74, %76 : vector<2x128xf32>
    %c0_21 = arith.constant 0 : index
    %c0_22 = arith.constant 0 : index
    %78 = vector.load %arg6[%c0_21, %c0_22] : memref<2x128xf32, #tpu.memory_space<vmem>>, vector<2x128xf32>
    tpu.vector_store %arg6[%c0_21, %c0_22], %77 {strides = array<i32>} : memref<2x128xf32, #tpu.memory_space<vmem>>, vector<2x128xf32>,
    return
  }
  func.func @transform_0(%arg0: i32) -> (i32, i32) {
    %c0_i32 = arith.constant 0 : i32
    %c0_i32_0 = arith.constant 0 : i32
    %c0_i32_1 = arith.constant 0 : i32
    return %c0_i32, %c0_i32_0 : i32, i32
  }
  func.func @transform_1(%arg0: i32) -> (i32, i32) {
    %c0_i32 = arith.constant 0 : i32
    %c0_i32_0 = arith.constant 0 : i32
    %c0_i32_1 = arith.constant 0 : i32
    return %c0_i32, %c0_i32_0 : i32, i32
  }
  func.func @transform_2(%arg0: i32) -> (i32, i32) {
    %c0_i32 = arith.constant 0 : i32
    %c0_i32_0 = arith.constant 0 : i32
    %c0_i32_1 = arith.constant 0 : i32
    return %c0_i32, %c0_i32_0 : i32, i32
  }
  func.func @transform_3(%arg0: i32) -> (i32, i32) {
    %c0_i32 = arith.constant 0 : i32
    %c0_i32_0 = arith.constant 0 : i32
    %c0_i32_1 = arith.constant 0 : i32
    return %c0_i32, %c0_i32_0 : i32, i32
  }
  func.func @transform_4(%arg0: i32) -> (i32, i32) {
    %c0_i32 = arith.constant 0 : i32
    %c0_i32_0 = arith.constant 0 : i32
    %c0_i32_1 = arith.constant 0 : i32
    return %c0_i32, %c0_i32_0 : i32, i32
  }
  func.func @transform_5(%arg0: i32) -> (i32, i32) {
    %c0_i32 = arith.constant 0 : i32
    %c0_i32_0 = arith.constant 0 : i32
    %c0_i32_1 = arith.constant 0 : i32
    return %c0_i32, %c0_i32_0 : i32, i32
  }
}

</mosaic_0001>

<llo_original>
// kernel: tpu_custom_call.1
$region0: #{tpu_custom_call.1}
  #allocation0 [shape = 'u32[]', space=smem, size = 0x4, offset = 0x4, fixed_abs, tag = 'smem constant byte address 0x4 - core index']
  #allocation1 [shape = 'u32[72,128]{1,0:T(1,128)}', space=vmem, size = 0x9000, scoped, tag = 'internal scratch']
  %s0 = inlined_call_operand.hbm [shape: bf16[32,160], index: 0, kind: input, shape index: {}]
  %s1 = inlined_call_operand.hbm [shape: bf16[160,256], index: 1, kind: input, shape index: {}]
  %s2 = inlined_call_operand.hbm [shape: f32[1,256], index: 2, kind: input, shape index: {}]
  %s3 = inlined_call_operand.hbm [shape: bf16[256,128], index: 3, kind: input, shape index: {}]
  %s4 = inlined_call_operand.vmem [shape: f32[1,128], index: 4, kind: input, shape index: {}]
  %s5 = inlined_call_operand.hbm [shape: f32[2,128], index: 5, kind: output, shape index: {}]
  %s6 = sld [smem:[#allocation0]]
  $region46: #{tpu_custom_call.1} parent=0
    _
  %s8 = ssub.s32 1, %s6
  %s9 = scalar_select 0, %s8, %s6
  $region1: #{tpu_custom_call.1} parent=0
    #allocation2 [shape = 'u8[16384]{0}', space=vmem, size = 0x4000, scoped, tag = 'input window, operand 0, single buffered']
    #allocation3 [shape = 's32[1]{0}', space=sflag, size = 0x4, scoped, tag = 'scoped memory for tpu_custom_call.1']
    #allocation4 [shape = 's32[1]{0}', space=sflag, size = 0x4, scoped, tag = 'scoped memory for tpu_custom_call.1']
    #allocation5 [shape = 'u8[81920]{0}', space=vmem, size = 0x14000, scoped, tag = 'input window, operand 1, single buffered']
    #allocation6 [shape = 's32[1]{0}', space=sflag, size = 0x4, scoped, tag = 'scoped memory for tpu_custom_call.1']
    #allocation7 [shape = 'u8[1024]{0}', space=vmem, size = 0x400, scoped, tag = 'input window, operand 2, single buffered']
    #allocation8 [shape = 'u8[65536]{0}', space=vmem, size = 0x10000, scoped, tag = 'input window, operand 3, single buffered']
    #allocation9 [shape = 's32[1]{0}', space=sflag, size = 0x4, scoped, tag = 'scoped memory for tpu_custom_call.1']
    #allocation10 [shape = 'u8[1024]{0}', space=vmem, size = 0x400, scoped, tag = 'output window, operand 0, single buffered']
    %10 = vsyncpa [#allocation3], 0
    %11 = vsyncpa [#allocation6], 0
    %12 = vsyncpa [#allocation9], 0
    %13 = vsyncpa [#allocation4], 0
    // Predicated region
    $region2: #{tpu_custom_call.1} parent=1 // pred_check
      _
    $region3: #{tpu_custom_call.1} parent=1 // pred_check_branch
      %15 = sbr.rel (0) target = $region5
    $region4: #{tpu_custom_call.1} parent=1 // pred_region
      %17 = vsyncadd [#allocation3], 0
      %s18 = sshll.u32 %s0, 4
      %s19 = int_to_ptr.hbm [resolvable:$true] %s18
      %s20 = sshll.u32 [#allocation2], 4
      %s21 = int_to_ptr.vmem [resolvable:$true] %s20
      %26 = dma.hbm_to_vmem [thread:$0]  %s19, 512, %s21, [#allocation3], 128, 128, 8
    $region5: #{tpu_custom_call.1} parent=1 // pred_fallthru
      _
    // Predicated region
    $region6: #{tpu_custom_call.1} parent=1 // pred_check
      _
    $region7: #{tpu_custom_call.1} parent=1 // pred_check_branch
      %28 = sbr.rel (0) target = $region9
    $region8: #{tpu_custom_call.1} parent=1 // pred_region
      %30 = vsyncadd [#allocation6], 0
      %s31 = sshll.u32 %s1, 4
      %s32 = int_to_ptr.hbm [resolvable:$true] %s31
      %s33 = sshll.u32 [#allocation5], 4
      %s34 = int_to_ptr.vmem [resolvable:$true] %s33
      %39 = dma.hbm_to_vmem [thread:$0]  %s32, 2560, %s34, [#allocation6], 128, 128, 8
    $region9: #{tpu_custom_call.1} parent=1 // pred_fallthru
      _
    // Predicated region
    $region10: #{tpu_custom_call.1} parent=1 // pred_check
      _
    $region11: #{tpu_custom_call.1} parent=1 // pred_check_branch
      %41 = sbr.rel (0) target = $region13
    $region12: #{tpu_custom_call.1} parent=1 // pred_region
      %43 = vsyncadd [#allocation6], 0
      %s45 = sshll.u32 %s2, 4
      %s46 = int_to_ptr.hbm [resolvable:$true] %s45
      %s47 = sshll.u32 [#allocation7], 4
      %s48 = int_to_ptr.vmem [resolvable:$true] %s47
      %50 = dma.hbm_to_vmem [thread:$0]  %s46, 32, %s48, [#allocation6]
    $region13: #{tpu_custom_call.1} parent=1 // pred_fallthru
      _
    // Predicated region
    $region14: #{tpu_custom_call.1} parent=1 // pred_check
      _
    $region15: #{tpu_custom_call.1} parent=1 // pred_check_branch
      %52 = sbr.rel (0) target = $region17
    $region16: #{tpu_custom_call.1} parent=1 // pred_region
      %54 = vsyncadd [#allocation9], 0
      %s55 = sshll.u32 %s3, 4
      %s56 = int_to_ptr.hbm [resolvable:$true] %s55
      %s57 = sshll.u32 [#allocation8], 4
      %s58 = int_to_ptr.vmem [resolvable:$true] %s57
      %63 = dma.hbm_to_vmem [thread:$0]  %s56, 2048, %s58, [#allocation9], 64, 64, 4
    $region17: #{tpu_custom_call.1} parent=1 // pred_fallthru
      _
    // Predicated region
    $region18: #{tpu_custom_call.1} parent=1 // pred_check
      _
    $region19: #{tpu_custom_call.1} parent=1 // pred_check_branch
      %65 = sbr.rel (0) target = $region21
    $region20: #{tpu_custom_call.1} parent=1 // pred_region
      _
    $region21: #{tpu_custom_call.1} parent=1 // pred_fallthru
      _
    // Predicated region
    $region22: #{tpu_custom_call.1} parent=1 // pred_check
      _
    $region23: #{tpu_custom_call.1} parent=1 // pred_check_branch
      %67 = sbr.rel (0) target = $region25
    $region24: #{tpu_custom_call.1} parent=1 // pred_region
      %69 = dma.done [#allocation3], 512
    $region25: #{tpu_custom_call.1} parent=1 // pred_fallthru
      _
    // Predicated region
    $region26: #{tpu_custom_call.1} parent=1 // pred_check
      _
    $region27: #{tpu_custom_call.1} parent=1 // pred_check_branch
      %71 = sbr.rel (0) target = $region29
    $region28: #{tpu_custom_call.1} parent=1 // pred_region
      %73 = dma.done [#allocation6], 2560
    $region29: #{tpu_custom_call.1} parent=1 // pred_fallthru
      _
    // Predicated region
    $region30: #{tpu_custom_call.1} parent=1 // pred_check
      _
    $region31: #{tpu_custom_call.1} parent=1 // pred_check_branch
      %75 = sbr.rel (0) target = $region33
    $region32: #{tpu_custom_call.1} parent=1 // pred_region
      %77 = dma.done [#allocation6], 32
    $region33: #{tpu_custom_call.1} parent=1 // pred_fallthru
      _
    // Predicated region
    $region34: #{tpu_custom_call.1} parent=1 // pred_check
      _
    $region35: #{tpu_custom_call.1} parent=1 // pred_check_branch
      %79 = sbr.rel (0) target = $region37
    $region36: #{tpu_custom_call.1} parent=1 // pred_region
      %81 = dma.done [#allocation9], 2048
    $region37: #{tpu_custom_call.1} parent=1 // pred_fallthru
      _
    %v83 = vld [vmem:[#allocation2] sm:$0xff]
    %v84 = vld [vmem:[#allocation2 + $0x8] sm:$0xff]
    %v85 = vld [vmem:[#allocation2 + $0x10] sm:$0xff]
    %v86 = vld [vmem:[#allocation2 + $0x18] sm:$0xff]
    %v87 = vld [vmem:[#allocation5] sm:$0xff]
    %v88 = vld [vmem:[#allocation5 + $0x8] sm:$0xff]
    %v89 = vld [vmem:[#allocation5 + $0x10] sm:$0xff]
    %v90 = vld [vmem:[#allocation5 + $0x18] sm:$0xff]
    %v91 = vld [vmem:[#allocation5 + $0x20] sm:$0xff]
    %v92 = vld [vmem:[#allocation5 + $0x28] sm:$0xff]
    %v93 = vld [vmem:[#allocation5 + $0x30] sm:$0xff]
    %v94 = vld [vmem:[#allocation5 + $0x38] sm:$0xff]
    %v95 = vld [vmem:[#allocation5 + $0x40] sm:$0xff]
    %v96 = vld [vmem:[#allocation5 + $0x48] sm:$0xff]
    %v97 = vld [vmem:[#allocation5 + $0x50] sm:$0xff]
    %v98 = vld [vmem:[#allocation5 + $0x58] sm:$0xff]
    %v99 = vld [vmem:[#allocation5 + $0x60] sm:$0xff]
    %v100 = vld [vmem:[#allocation5 + $0x68] sm:$0xff]
    %v101 = vld [vmem:[#allocation5 + $0x70] sm:$0xff]
    %v102 = vld [vmem:[#allocation5 + $0x78] sm:$0xff]
    %v103 = vld [vmem:[#allocation5 + $0x80] sm:$0xff]
    %v104 = vld [vmem:[#allocation5 + $0x88] sm:$0xff]
    %v105 = vld [vmem:[#allocation5 + $0x90] sm:$0xff]
    %v106 = vld [vmem:[#allocation5 + $0x98] sm:$0xff]
    %v107 = vld [vmem:[#allocation7] sm:$0x3]
    %v109 = vperm.slane %v107, 0
    %v110 = vperm.slane %v107, 1
    %v117 = vunpack.c.l.b16 %v83
    %v118 = vunpack.c.h.b16 %v83
    %v119 = vunpack.c.l.b16 %v84
    %v120 = vunpack.c.h.b16 %v84
    %v121 = vunpack.c.l.b16 %v85
    %v122 = vunpack.c.h.b16 %v85
    %v123 = vunpack.c.l.b16 %v86
    %v124 = vunpack.c.h.b16 %v86
    %v125 = vpack.c.b16 %v119, %v117
    %v126 = vpack.c.b16 %v120, %v118
    %v127 = vpack.c.b16 %v123, %v121
    %v128 = vpack.c.b16 %v124, %v122
    %v151 = vunpack.c.l.b16 %v87
    %v152 = vunpack.c.h.b16 %v87
    %v153 = vunpack.c.l.b16 %v88
    %v154 = vunpack.c.h.b16 %v88
    %v155 = vunpack.c.l.b16 %v89
    %v156 = vunpack.c.h.b16 %v89
    %v157 = vunpack.c.l.b16 %v90
    %v158 = vunpack.c.h.b16 %v90
    %v159 = vunpack.c.l.b16 %v91
    %v160 = vunpack.c.h.b16 %v91
    %v161 = vunpack.c.l.b16 %v92
    %v162 = vunpack.c.h.b16 %v92
    %v163 = vunpack.c.l.b16 %v93
    %v164 = vunpack.c.h.b16 %v93
    %v165 = vunpack.c.l.b16 %v94
    %v166 = vunpack.c.h.b16 %v94
    %v167 = vunpack.c.l.b16 %v95
    %v168 = vunpack.c.h.b16 %v95
    %v169 = vunpack.c.l.b16 %v96
    %v170 = vunpack.c.h.b16 %v96
    %v171 = vunpack.c.l.b16 %v97
    %v172 = vunpack.c.h.b16 %v97
    %v173 = vunpack.c.l.b16 %v98
    %v174 = vunpack.c.h.b16 %v98
    %v175 = vunpack.c.l.b16 %v99
    %v176 = vunpack.c.h.b16 %v99
    %v177 = vunpack.c.l.b16 %v100
    %v178 = vunpack.c.h.b16 %v100
    %v179 = vunpack.c.l.b16 %v101
    %v180 = vunpack.c.h.b16 %v101
    %v181 = vunpack.c.l.b16 %v102
    %v182 = vunpack.c.h.b16 %v102
    %v183 = vunpack.c.l.b16 %v103
    %v184 = vunpack.c.h.b16 %v103
    %v185 = vunpack.c.l.b16 %v104
    %v186 = vunpack.c.h.b16 %v104
    %v187 = vunpack.c.l.b16 %v105
    %v188 = vunpack.c.h.b16 %v105
    %v189 = vunpack.c.l.b16 %v106
    %v190 = vunpack.c.h.b16 %v106
    %v191 = vpack.c.b16 %v153, %v151
    %v192 = vpack.c.b16 %v154, %v152
    %v193 = vpack.c.b16 %v157, %v155
    %v194 = vpack.c.b16 %v158, %v156
    %v195 = vpack.c.b16 %v161, %v159
    %v196 = vpack.c.b16 %v162, %v160
    %v197 = vpack.c.b16 %v165, %v163
    %v198 = vpack.c.b16 %v166, %v164
    %v199 = vpack.c.b16 %v169, %v167
    %v200 = vpack.c.b16 %v170, %v168
    %v201 = vpack.c.b16 %v173, %v171
    %v202 = vpack.c.b16 %v174, %v172
    %v203 = vpack.c.b16 %v177, %v175
    %v204 = vpack.c.b16 %v178, %v176
    %v205 = vpack.c.b16 %v181, %v179
    %v206 = vpack.c.b16 %v182, %v180
    %v207 = vpack.c.b16 %v185, %v183
    %v208 = vpack.c.b16 %v186, %v184
    %v209 = vpack.c.b16 %v189, %v187
    %v210 = vpack.c.b16 %v190, %v188
    %vm231 = vcmask 261120
    %v233 = vsel %vm231, %v126, 0
    %v236 = vsel %vm231, %v128, 0
    %238 = vmatpush.bf16.msra.mxu0 %v205
    %239 = vmatpush.bf16.msra.mxu0 %v203
    %240 = vmatpush.bf16.msra.mxu0 %v201
    %241 = vmatpush.bf16.msra.mxu0 %v199
    %242 = vmatpush.bf16.msra.mxu0 %v197
    %243 = vmatpush.bf16.msra.mxu0 %v195
    %244 = vmatpush.bf16.msra.mxu0 %v193
    %245 = vmatpush.bf16.msra.mxu0 %v191
    %246 = vmatmul.bf16.gmra.mxu0 %v125
    %v247 = vpop.f32.mrf.mxu0
    %v248 = vadd.f32 %v109, %v247
    %v249 = vpop.f32.mrf.mxu0
    %v250 = vadd.f32 %v109, %v249
    %251 = vmatmul.bf16.gmra.mxu0 %v127
    %v252 = vpop.f32.mrf.mxu0
    %v253 = vadd.f32 %v109, %v252
    %v254 = vpop.f32.mrf.mxu0
    %v255 = vadd.f32 %v109, %v254
    %256 = vdwg.mxu0
    %257 = vmatpush.bf16.msra.mxu0 0
    %258 = vmatpush.bf16.msra.mxu0 0
    %259 = vmatpush.bf16.msra.mxu0 0
    %260 = vmatpush.bf16.msra.mxu0 0
    %261 = vmatpush.bf16.msra.mxu0 0
    %262 = vmatpush.bf16.msra.mxu0 0
    %263 = vmatpush.bf16.msra.mxu0 %v209
    %264 = vmatpush.bf16.msra.mxu0 %v207
    %265 = vmatmul.bf16.gmra.mxu0 %v233
    %v266 = vpop.f32.mrf.mxu0
    %v267 = vadd.f32 %v248, %v266
    %v268 = vpop.f32.mrf.mxu0
    %v269 = vadd.f32 %v250, %v268
    %270 = vmatmul.bf16.gmra.mxu0 %v236
    %v271 = vpop.f32.mrf.mxu0
    %v272 = vadd.f32 %v253, %v271
    %v273 = vpop.f32.mrf.mxu0
    %v274 = vadd.f32 %v255, %v273
    %275 = vdwg.mxu0
    %276 = vmatpush.bf16.msra.mxu0 %v206
    %277 = vmatpush.bf16.msra.mxu0 %v204
    %278 = vmatpush.bf16.msra.mxu0 %v202
    %279 = vmatpush.bf16.msra.mxu0 %v200
    %280 = vmatpush.bf16.msra.mxu0 %v198
    %281 = vmatpush.bf16.msra.mxu0 %v196
    %282 = vmatpush.bf16.msra.mxu0 %v194
    %283 = vmatpush.bf16.msra.mxu0 %v192
    %284 = vmatmul.bf16.gmra.mxu0 %v125
    %v285 = vpop.f32.mrf.mxu0
    %v286 = vadd.f32 %v110, %v285
    %v287 = vpop.f32.mrf.mxu0
    %v288 = vadd.f32 %v110, %v287
    %289 = vmatmul.bf16.gmra.mxu0 %v127
    %v290 = vpop.f32.mrf.mxu0
    %v291 = vadd.f32 %v110, %v290
    %v292 = vpop.f32.mrf.mxu0
    %v293 = vadd.f32 %v110, %v292
    %294 = vdwg.mxu0
    %295 = vmatpush.bf16.msra.mxu0 0
    %296 = vmatpush.bf16.msra.mxu0 0
    %297 = vmatpush.bf16.msra.mxu0 0
    %298 = vmatpush.bf16.msra.mxu0 0
    %299 = vmatpush.bf16.msra.mxu0 0
    %300 = vmatpush.bf16.msra.mxu0 0
    %301 = vmatpush.bf16.msra.mxu0 %v210
    %302 = vmatpush.bf16.msra.mxu0 %v208
    %303 = vmatmul.bf16.gmra.mxu0 %v233
    %v304 = vpop.f32.mrf.mxu0
    %v305 = vadd.f32 %v286, %v304
    %v306 = vpop.f32.mrf.mxu0
    %v307 = vadd.f32 %v288, %v306
    %308 = vmatmul.bf16.gmra.mxu0 %v236
    %v309 = vpop.f32.mrf.mxu0
    %v310 = vadd.f32 %v291, %v309
    %v311 = vpop.f32.mrf.mxu0
    %v312 = vadd.f32 %v293, %v311
    %313 = vdwg.mxu0
    %v314 = vmax.f32 %v267, 0.0
    %v315 = vmax.f32 %v305, 0.0
    %v316 = vmax.f32 %v269, 0.0
    %v317 = vmax.f32 %v307, 0.0
    %v318 = vmax.f32 %v272, 0.0
    %v319 = vmax.f32 %v310, 0.0
    %v320 = vmax.f32 %v274, 0.0
    %v321 = vmax.f32 %v312, 0.0
    %v322 = vlaneseq
    %v323 = vshrl.u32 %v322, 7
    %v324 = vadd.s32 %v323, 8
    %v325 = vadd.s32 %v323, 16
    %v326 = vadd.s32 %v323, 24
    %v327 = vlaneseq
    %v328 = vand.u32 %v327, 127
    %v329 = vadd.s32 %v328, 128
    %vm330 = vcmp.lt.s32.totalorder %v323, 0
    %v331 = vsub.s32 0, %v323
    %v332 = vsel %vm330, %v331, %v323
    %v333 = vshrl.u32 %v332, 4
    %v334 = vand.u32 %v332, 15
    %v335 = vsub.s32 0, %v334
    %v336 = vsel %vm330, %v335, %v334
    %vm337 = vcmp.lt.s32.totalorder %v324, 0
    %v338 = vsub.s32 0, %v324
    %v339 = vsel %vm337, %v338, %v324
    %v340 = vshrl.u32 %v339, 4
    %v341 = vand.u32 %v339, 15
    %v342 = vsub.s32 0, %v341
    %v343 = vsel %vm337, %v342, %v341
    %vm344 = vcmp.lt.s32.totalorder %v325, 0
    %v345 = vsub.s32 0, %v325
    %v346 = vsel %vm344, %v345, %v325
    %v347 = vshrl.u32 %v346, 4
    %v348 = vand.u32 %v346, 15
    %v349 = vsub.s32 0, %v348
    %v350 = vsel %vm344, %v349, %v348
    %vm351 = vcmp.lt.s32.totalorder %v326, 0
    %v352 = vsub.s32 0, %v326
    %v353 = vsel %vm351, %v352, %v326
    %v354 = vshrl.u32 %v353, 4
    %v355 = vand.u32 %v353, 15
    %v356 = vsub.s32 0, %v355
    %v357 = vsel %vm351, %v356, %v355
    %vm358 = vcmp.ne.s32.totalorder %v336, 0
    %vm359 = vcmp.ne.s32.totalorder %v343, 0
    %vm360 = vcmp.ne.s32.totalorder %v350, 0
    %vm361 = vcmp.ne.s32.totalorder %v357, 0
    %vm362 = vcmp.lt.s32.totalorder %v336, 0
    %vm363 = vcmp.lt.s32.totalorder %v343, 0
    %vm364 = vcmp.lt.s32.totalorder %v350, 0
    %vm365 = vcmp.lt.s32.totalorder %v357, 0
    %vm366 = vmand %vm362, %vm358
    %vm367 = vmand %vm363, %vm359
    %vm368 = vmand %vm364, %vm360
    %vm369 = vmand %vm365, %vm361
    %v370 = vadd.s32 %v336, 16
    %v371 = vadd.s32 %v343, 16
    %v372 = vadd.s32 %v350, 16
    %v373 = vadd.s32 %v357, 16
    %v374 = vsel %vm366, %v370, %v336
    %v375 = vsel %vm367, %v371, %v343
    %v376 = vsel %vm368, %v372, %v350
    %v377 = vsel %vm369, %v373, %v357
    %vm378 = vcmp.ge.s32.totalorder %v328, 0
    %vm379 = vcmp.ge.s32.totalorder %v329, 0
    %vm380 = vcmp.lt.s32.totalorder %v328, 64
    %vm381 = vcmp.lt.s32.totalorder %v329, 64
    %vm382 = vmand %vm378, %vm380
    %vm383 = vmand %vm379, %vm381
    %vm384 = vcmp.lt.s32.totalorder %v374, 15
    %vm385 = vcmp.lt.s32.totalorder %v375, 15
    %vm386 = vcmp.lt.s32.totalorder %v376, 15
    %vm387 = vcmp.lt.s32.totalorder %v377, 15
    %vm388 = vmand %vm382, %vm384
    %vm389 = vmand %vm383, %vm384
    %vm390 = vmand %vm382, %vm385
    %vm391 = vmand %vm383, %vm385
    %vm392 = vmand %vm382, %vm386
    %vm393 = vmand %vm383, %vm386
    %vm394 = vmand %vm382, %vm387
    %vm395 = vmand %vm383, %vm387
    %vm396 = vcmp.ge.s32.totalorder %v328, 64
    %vm397 = vcmp.ge.s32.totalorder %v329, 64
    %vm398 = vcmp.lt.s32.totalorder %v328, 128
    %vm399 = vcmp.lt.s32.totalorder %v329, 128
    %vm400 = vmand %vm396, %vm398
    %vm401 = vmand %vm397, %vm399
    %vm402 = vcmp.lt.s32.totalorder %v374, 14
    %vm403 = vcmp.lt.s32.totalorder %v375, 14
    %vm404 = vcmp.lt.s32.totalorder %v376, 14
    %vm405 = vcmp.lt.s32.totalorder %v377, 14
    %vm406 = vmand %vm400, %vm402
    %vm407 = vmand %vm401, %vm402
    %vm408 = vmand %vm400, %vm403
    %vm409 = vmand %vm401, %vm403
    %vm410 = vmand %vm400, %vm404
    %vm411 = vmand %vm401, %vm404
    %vm412 = vmand %vm400, %vm405
    %vm413 = vmand %vm401, %vm405
    %vm414 = vmor %vm388, %vm406
    %vm415 = vmor %vm389, %vm407
    %vm416 = vmor %vm390, %vm408
    %vm417 = vmor %vm391, %vm409
    %vm418 = vmor %vm392, %vm410
    %vm419 = vmor %vm393, %vm411
    %vm420 = vmor %vm394, %vm412
    %vm421 = vmor %vm395, %vm413
    %vm422 = vcmp.ge.s32.totalorder %v328, 128
    %vm423 = vcmp.ge.s32.totalorder %v329, 128
    %vm424 = vcmp.lt.s32.totalorder %v328, 192
    %vm425 = vcmp.lt.s32.totalorder %v329, 192
    %vm426 = vmand %vm422, %vm424
    %vm427 = vmand %vm423, %vm425
    %vm428 = vcmp.lt.s32.totalorder %v374, 13
    %vm429 = vcmp.lt.s32.totalorder %v375, 13
    %vm430 = vcmp.lt.s32.totalorder %v376, 13
    %vm431 = vcmp.lt.s32.totalorder %v377, 13
    %vm432 = vmand %vm426, %vm428
    %vm433 = vmand %vm427, %vm428
    %vm434 = vmand %vm426, %vm429
    %vm435 = vmand %vm427, %vm429
    %vm436 = vmand %vm426, %vm430
    %vm437 = vmand %vm427, %vm430
    %vm438 = vmand %vm426, %vm431
    %vm439 = vmand %vm427, %vm431
    %vm440 = vmor %vm414, %vm432
    %vm441 = vmor %vm415, %vm433
    %vm442 = vmor %vm416, %vm434
    %vm443 = vmor %vm417, %vm435
    %vm444 = vmor %vm418, %vm436
    %vm445 = vmor %vm419, %vm437
    %vm446 = vmor %vm420, %vm438
    %vm447 = vmor %vm421, %vm439
    %vm448 = vcmp.ge.s32.totalorder %v328, 192
    %vm449 = vcmp.ge.s32.totalorder %v329, 192
    %vm450 = vcmp.lt.s32.totalorder %v328, 256
    %vm451 = vcmp.lt.s32.totalorder %v329, 256
    %vm452 = vmand %vm448, %vm450
    %vm453 = vmand %vm449, %vm451
    %vm454 = vcmp.lt.s32.totalorder %v374, 12
    %vm455 = vcmp.lt.s32.totalorder %v375, 12
    %vm456 = vcmp.lt.s32.totalorder %v376, 12
    %vm457 = vcmp.lt.s32.totalorder %v377, 12
    %vm458 = vmand %vm452, %vm454
    %vm459 = vmand %vm453, %vm454
    %vm460 = vmand %vm452, %vm455
    %vm461 = vmand %vm453, %vm455
    %vm462 = vmand %vm452, %vm456
    %vm463 = vmand %vm453, %vm456
    %vm464 = vmand %vm452, %vm457
    %vm465 = vmand %vm453, %vm457
    %vm466 = vmor %vm440, %vm458
    %vm467 = vmor %vm441, %vm459
    %vm468 = vmor %vm442, %vm460
    %vm469 = vmor %vm443, %vm461
    %vm470 = vmor %vm444, %vm462
    %vm471 = vmor %vm445, %vm463
    %vm472 = vmor %vm446, %vm464
    %vm473 = vmor %vm447, %vm465
    %v474 = vsel %vm466, %v314, 0.0
    %v475 = vsel %vm467, %v315, 0.0
    %v476 = vsel %vm468, %v316, 0.0
    %v477 = vsel %vm469, %v317, 0.0
    %v478 = vsel %vm470, %v318, 0.0
    %v479 = vsel %vm471, %v319, 0.0
    %v480 = vsel %vm472, %v320, 0.0
    %v481 = vsel %vm473, %v321, 0.0
    %v482 = vmax.f32 %v474, %v476
    %v483 = vrot.slane %v482, 4
    %v484 = vmax.f32 %v482, %v483
    %v485 = vrot.slane %v484, 2
    %v486 = vmax.f32 %v484, %v485
    %v487 = vrot.slane %v486, 1
    %v488 = vmax.f32 %v486, %v487
    %v489 = vmax.f32 %v475, %v477
    %v490 = vrot.slane %v489, 4
    %v491 = vmax.f32 %v489, %v490
    %v492 = vrot.slane %v491, 2
    %v493 = vmax.f32 %v491, %v492
    %v494 = vrot.slane %v493, 1
    %v495 = vmax.f32 %v493, %v494
    %v496 = vmax.f32 %v478, %v480
    %v497 = vrot.slane %v496, 4
    %v498 = vmax.f32 %v496, %v497
    %v499 = vrot.slane %v498, 2
    %v500 = vmax.f32 %v498, %v499
    %v501 = vrot.slane %v500, 1
    %v502 = vmax.f32 %v500, %v501
    %v503 = vmax.f32 %v479, %v481
    %v504 = vrot.slane %v503, 4
    %v505 = vmax.f32 %v503, %v504
    %v506 = vrot.slane %v505, 2
    %v507 = vmax.f32 %v505, %v506
    %v508 = vrot.slane %v507, 1
    %v509 = vmax.f32 %v507, %v508
    %vm510 = vcmask 1040384
    %v511 = vsel %vm510, %v488, %v502
    %v512 = vsel %vm510, %v495, %v509
    %v513 = vpack.c.bf16 %v511, %v511
    %v514 = vpack.c.bf16 %v512, %v512
    %v515 = vld [vmem:[#allocation8] sm:$0xf]
    %v516 = vld [vmem:[#allocation8 + $0x4] sm:$0xf]
    %v517 = vld [vmem:[#allocation8 + $0x8] sm:$0xf]
    %v518 = vld [vmem:[#allocation8 + $0xc] sm:$0xf]
    %v519 = vld [vmem:[#allocation8 + $0x10] sm:$0xf]
    %v520 = vld [vmem:[#allocation8 + $0x14] sm:$0xf]
    %v521 = vld [vmem:[#allocation8 + $0x18] sm:$0xf]
    %v522 = vld [vmem:[#allocation8 + $0x1c] sm:$0xf]
    %v523 = vld [vmem:[#allocation8 + $0x20] sm:$0xf]
    %v524 = vld [vmem:[#allocation8 + $0x24] sm:$0xf]
    %v525 = vld [vmem:[#allocation8 + $0x28] sm:$0xf]
    %v526 = vld [vmem:[#allocation8 + $0x2c] sm:$0xf]
    %v527 = vld [vmem:[#allocation8 + $0x30] sm:$0xf]
    %v528 = vld [vmem:[#allocation8 + $0x34] sm:$0xf]
    %v529 = vld [vmem:[#allocation8 + $0x38] sm:$0xf]
    %v530 = vld [vmem:[#allocation8 + $0x3c] sm:$0xf]
    %v531 = vld [vmem:[#allocation8 + $0x40] sm:$0xf]
    %v532 = vld [vmem:[#allocation8 + $0x44] sm:$0xf]
    %v533 = vld [vmem:[#allocation8 + $0x48] sm:$0xf]
    %v534 = vld [vmem:[#allocation8 + $0x4c] sm:$0xf]
    %v535 = vld [vmem:[#allocation8 + $0x50] sm:$0xf]
    %v536 = vld [vmem:[#allocation8 + $0x54] sm:$0xf]
    %v537 = vld [vmem:[#allocation8 + $0x58] sm:$0xf]
    %v538 = vld [vmem:[#allocation8 + $0x5c] sm:$0xf]
    %v539 = vld [vmem:[#allocation8 + $0x60] sm:$0xf]
    %v540 = vld [vmem:[#allocation8 + $0x64] sm:$0xf]
    %v541 = vld [vmem:[#allocation8 + $0x68] sm:$0xf]
    %v542 = vld [vmem:[#allocation8 + $0x6c] sm:$0xf]
    %v543 = vld [vmem:[#allocation8 + $0x70] sm:$0xf]
    %v544 = vld [vmem:[#allocation8 + $0x74] sm:$0xf]
    %v545 = vld [vmem:[#allocation8 + $0x78] sm:$0xf]
    %v546 = vld [vmem:[#allocation8 + $0x7c] sm:$0xf]
    %v547 = vld [vmem:[%s4] sm:$0x1]
    %v549 = vperm.slane %v547, 0
    %v583 = vunpack.c.l.b16 %v515
    %v584 = vunpack.c.l.b16 %v516
    %v585 = vunpack.c.l.b16 %v517
    %v586 = vunpack.c.l.b16 %v518
    %v587 = vunpack.c.l.b16 %v519
    %v588 = vunpack.c.l.b16 %v520
    %v589 = vunpack.c.l.b16 %v521
    %v590 = vunpack.c.l.b16 %v522
    %v591 = vunpack.c.l.b16 %v523
    %v592 = vunpack.c.l.b16 %v524
    %v593 = vunpack.c.l.b16 %v525
    %v594 = vunpack.c.l.b16 %v526
    %v595 = vunpack.c.l.b16 %v527
    %v596 = vunpack.c.l.b16 %v528
    %v597 = vunpack.c.l.b16 %v529
    %v598 = vunpack.c.l.b16 %v530
    %v599 = vunpack.c.l.b16 %v531
    %v600 = vunpack.c.l.b16 %v532
    %v601 = vunpack.c.l.b16 %v533
    %v602 = vunpack.c.l.b16 %v534
    %v603 = vunpack.c.l.b16 %v535
    %v604 = vunpack.c.l.b16 %v536
    %v605 = vunpack.c.l.b16 %v537
    %v606 = vunpack.c.l.b16 %v538
    %v607 = vunpack.c.l.b16 %v539
    %v608 = vunpack.c.l.b16 %v540
    %v609 = vunpack.c.l.b16 %v541
    %v610 = vunpack.c.l.b16 %v542
    %v611 = vunpack.c.l.b16 %v543
    %v612 = vunpack.c.l.b16 %v544
    %v613 = vunpack.c.l.b16 %v545
    %v614 = vunpack.c.l.b16 %v546
    %v615 = vpack.c.b16 %v584, %v583
    %v616 = vpack.c.b16 %v586, %v585
    %v617 = vpack.c.b16 %v588, %v587
    %v618 = vpack.c.b16 %v590, %v589
    %v619 = vpack.c.b16 %v592, %v591
    %v620 = vpack.c.b16 %v594, %v593
    %v621 = vpack.c.b16 %v596, %v595
    %v622 = vpack.c.b16 %v598, %v597
    %v623 = vpack.c.b16 %v600, %v599
    %v624 = vpack.c.b16 %v602, %v601
    %v625 = vpack.c.b16 %v604, %v603
    %v626 = vpack.c.b16 %v606, %v605
    %v627 = vpack.c.b16 %v608, %v607
    %v628 = vpack.c.b16 %v610, %v609
    %v629 = vpack.c.b16 %v612, %v611
    %v630 = vpack.c.b16 %v614, %v613
    %647 = vmatpush.bf16.msra.mxu0 %v622
    %648 = vmatpush.bf16.msra.mxu0 %v621
    %649 = vmatpush.bf16.msra.mxu0 %v620
    %650 = vmatpush.bf16.msra.mxu0 %v619
    %651 = vmatpush.bf16.msra.mxu0 %v618
    %652 = vmatpush.bf16.msra.mxu0 %v617
    %653 = vmatpush.bf16.msra.mxu0 %v616
    %654 = vmatpush.bf16.msra.mxu0 %v615
    %655 = vmatmul.bf16.gmra.mxu0 %v513
    %v656 = vpop.f32.mrf.mxu0
    %v657 = vadd.f32 %v549, %v656
    %v658 = vpop.f32.mrf.mxu0
    %659 = vdwg.mxu0
    %660 = vmatpush.bf16.msra.mxu0 %v630
    %661 = vmatpush.bf16.msra.mxu0 %v629
    %662 = vmatpush.bf16.msra.mxu0 %v628
    %663 = vmatpush.bf16.msra.mxu0 %v627
    %664 = vmatpush.bf16.msra.mxu0 %v626
    %665 = vmatpush.bf16.msra.mxu0 %v625
    %666 = vmatpush.bf16.msra.mxu0 %v624
    %667 = vmatpush.bf16.msra.mxu0 %v623
    %668 = vmatmul.bf16.gmra.mxu0 %v514
    %v669 = vpop.f32.mrf.mxu0
    %v670 = vadd.f32 %v657, %v669
    %v671 = vpop.f32.mrf.mxu0
    %672 = vdwg.mxu0
    %673 = vst [vmem:[#allocation10] sm:$0x3] %v670
    // Predicated region
    $region38: #{tpu_custom_call.1} parent=1 // pred_check
      _
    $region39: #{tpu_custom_call.1} parent=1 // pred_check_branch
      %675 = sbr.rel (0) target = $region41
    $region40: #{tpu_custom_call.1} parent=1 // pred_region
      %677 = vsyncadd [#allocation4], 0
      %s679 = sshll.u32 [#allocation10], 4
      %s680 = int_to_ptr.vmem [resolvable:$true] %s679
      %s681 = sshll.u32 %s5, 4
      %s682 = int_to_ptr.hbm [resolvable:$true] %s681
      %684 = dma.vmem_to_hbm [thread:$0]  %s680, 32, %s682, [#allocation4]
    $region41: #{tpu_custom_call.1} parent=1 // pred_fallthru
      _
    // Predicated region
    $region42: #{tpu_custom_call.1} parent=1 // pred_check
      _
    $region43: #{tpu_custom_call.1} parent=1 // pred_check_branch
      %686 = sbr.rel (0) target = $region45
    $region44: #{tpu_custom_call.1} parent=1 // pred_region
      %688 = dma.done [#allocation4], 32
    $region45: #{tpu_custom_call.1} parent=1 // pred_fallthru
      _
    %689 = vsyncpa [#allocation3], 1
    %690 = vsyncpa [#allocation6], 1
    %691 = vsyncpa [#allocation9], 1
    %692 = vsyncpa [#allocation4], 1

</llo_original>
